<compile_context>
chip_gen: v6e
topology: v6e:2x2x1
jax: 0.10.0
libtpu: 0.0.40
codegen_flags: <defaults>
</compile_context>

<pallas_src>
import functools

import jax
import jax.numpy as jnp
from jax import lax
from jax.experimental import pallas as pl
from jax.experimental.pallas import tpu as pltpu

LANE = 128
SUBLANE = 8
H1_CHUNK = 128  # column-chunk width for the 512-wide first hidden layer


def _round_up(x, m):
    return ((x + m - 1) // m) * m


def _default_batch_tile():
    """128 on v5e (vreg/MXU fit), 256 on v6e/v7x/others."""
    try:
        kind = jax.devices()[0].device_kind.lower()
    except Exception:
        return 256
    if "v5 lite" in kind or "v5e" in kind or "v5litepod" in kind:
        return 128
    return 256


def actor_kernel(obs_ref, w1_ref, b1_ref, w2_ref, b2_ref, w3_ref, b3_ref,
                 out_ref, acc_ref, *, h1_chunk):
    cdt = w1_ref.dtype                       # MXU input dtype (bf16 or f32)
    x = obs_ref[...].astype(cdt)             # (TB, obs_dim), cast in-kernel
    d_h1 = w1_ref.shape[1]                   # 512
    n_chunks = d_h1 // h1_chunk

    # Layers 1 + 2 fused; hidden dim (512) blocked into `h1_chunk` columns so
    # only a (TB, h1_chunk) slice of h1 is live at any time:
    #   h2 = sum_c relu(x @ W1[:, c] + b1[c]) @ W2[c, :]
    # The accumulator lives in VMEM scratch -> bounded vreg pressure.
    acc_ref[...] = jnp.zeros_like(acc_ref)

    def chunk_body(c, carry):
        lo = pl.multiple_of(c * h1_chunk, h1_chunk)
        h1_c = jnp.dot(x, w1_ref[:, pl.ds(lo, h1_chunk)],
                       preferred_element_type=jnp.float32)
        h1_c = jnp.maximum(h1_c + b1_ref[:, pl.ds(lo, h1_chunk)], 0.0)  # f32 ReLU
        acc_ref[...] += jnp.dot(h1_c.astype(cdt),
                                w2_ref[pl.ds(lo, h1_chunk), :],
                                preferred_element_type=jnp.float32)
        return carry

    lax.fori_loop(0, n_chunks, chunk_body, 0, unroll=True)

    h2 = jnp.maximum(acc_ref[...] + b2_ref[...], 0.0)          # bias + ReLU (f32)

    # Layer 3 (+ tanh). Narrow (TB, action_dim) store -> minimal HBM writeback.
    h3 = jnp.dot(h2.astype(cdt), w3_ref[...],
                 preferred_element_type=jnp.float32) + b3_ref[...]
    out_ref[...] = jnp.tanh(h3).astype(out_ref.dtype)


def prepare_actor_params(params, compute_dtype=jnp.bfloat16):
    """One-time preprocessing (hoisted out of the per-call path):
    weights cast to the MXU input dtype, biases kept f32 and reshaped (1, N)."""
    def bias2d(b):
        return jnp.asarray(b, jnp.float32).reshape(1, -1)
    return {
        "w1": jnp.asarray(params["w1"], compute_dtype),
        "w2": jnp.asarray(params["w2"], compute_dtype),
        "w3": jnp.asarray(params["w3"], compute_dtype),
        "b1": bias2d(params["b1"]),
        "b2": bias2d(params["b2"]),
        "b3": bias2d(params["b3"]),
    }


def actor_forward(obs, prepared_params, *, batch_tile=None, h1_chunk=H1_CHUNK):
    """obs: (B, obs_dim) f32.  prepared_params: output of prepare_actor_params
    (weights as (in, out) in the MXU compute dtype, biases f32 (1, N))."""
    w1, b1 = prepared_params["w1"], prepared_params["b1"]
    w2, b2 = prepared_params["w2"], prepared_params["b2"]
    w3, b3 = prepared_params["w3"], prepared_params["b3"]

    B, obs_dim = obs.shape
    assert w1.shape[0] == obs_dim
    d_h1 = w1.shape[1]                       # 512
    d_h2 = w2.shape[1]                       # 128
    action_dim = w3.shape[1]
    assert d_h1 % h1_chunk == 0

    if batch_tile is None:
        batch_tile = _default_batch_tile()

    # ---- batch tiling: tiny B -> 1 step; mid B -> exactly 2 steps (both v7x
    # TensorCores busy via "parallel"); large B -> stream in batch_tile tiles.
    if B <= 2 * SUBLANE:
        tb = _round_up(B, SUBLANE)
    elif B <= 2 * batch_tile:
        tb = _round_up((B + 1) // 2, SUBLANE)
    else:
        tb = batch_tile
    bp = _round_up(B, tb)
    grid = (bp // tb,)

    obs_p = obs if bp == B else jnp.pad(obs, ((0, bp - B), (0, 0)))

    kernel = functools.partial(actor_kernel, h1_chunk=h1_chunk)
    const = lambda i: (0, 0)                 # weights/biases: resident in VMEM

    out_p = pl.pallas_call(
        kernel,
        out_shape=jax.ShapeDtypeStruct((bp, action_dim), jnp.float32),
        grid=grid,
        in_specs=[
            pl.BlockSpec((tb, obs_dim), lambda i: (i, 0)),   # obs: streamed over batch
            pl.BlockSpec((obs_dim, d_h1), const),            # W1
            pl.BlockSpec((1, d_h1), const),                  # b1
            pl.BlockSpec((d_h1, d_h2), const),               # W2
            pl.BlockSpec((1, d_h2), const),                  # b2
            pl.BlockSpec((d_h2, action_dim), const),         # W3
            pl.BlockSpec((1, action_dim), const),            # b3
        ],
        out_specs=pl.BlockSpec((tb, action_dim), lambda i: (i, 0)),
        scratch_shapes=[pltpu.VMEM((tb, d_h2), jnp.float32)],  # h2 accumulator
        compiler_params=pltpu.CompilerParams(
            dimension_semantics=("parallel",),
        ),
    )(obs_p, w1, b1, w2, b2, w3, b3)

    return out_p if bp == B else out_p[:B]


def init_actor_params(key, obs_dim, action_dim):
    """Deterministic init mimicking nn.Linear's U(-1/sqrt(fan_in), 1/sqrt(fan_in))."""
    def linear(k, fan_in, fan_out):
        kw, kb = jax.random.split(k)
        bound = 1.0 / jnp.sqrt(jnp.float32(fan_in))
        # Stored as (in, out) — transpose of PyTorch's (out, in).
        w = jax.random.uniform(kw, (fan_in, fan_out), jnp.float32, -bound, bound)
        b = jax.random.uniform(kb, (fan_out,), jnp.float32, -bound, bound)
        return w, b

    k1, k2, k3 = jax.random.split(key, 3)
    w1, b1 = linear(k1, obs_dim, 512)
    w2, b2 = linear(k2, 512, 128)
    w3, b3 = linear(k3, 128, action_dim)
    return {"w1": w1, "b1": b1, "w2": w2, "b2": b2, "w3": w3, "b3": b3}


def actor_ref(obs, params):
    """Pure-JAX f32 reference."""
    x = jnp.maximum(obs @ params["w1"] + params["b1"], 0.0)
    x = jnp.maximum(x @ params["w2"] + params["b2"], 0.0)
    return jnp.tanh(x @ params["w3"] + params["b3"])


def actor_ref_rounded(obs, params, compute_dtype):
    """Reference applying the same MXU-input rounding (incl. intermediate
    activations) as the kernel; accumulation / bias / tanh stay f32."""
    cd = compute_dtype
    h1 = jnp.maximum(
        jnp.dot(obs.astype(cd), params["w1"].astype(cd),
                preferred_element_type=jnp.float32) + params["b1"], 0.0)
    h2 = jnp.maximum(
        jnp.dot(h1.astype(cd), params["w2"].astype(cd),
                preferred_element_type=jnp.float32) + params["b2"], 0.0)
    h3 = jnp.dot(h2.astype(cd), params["w3"].astype(cd),
                 preferred_element_type=jnp.float32) + params["b3"]
    return jnp.tanh(h3)


if __name__ == "__main__":
    key = jax.random.PRNGKey(0)
    k_params, k_obs, k_obs_big = jax.random.split(key, 3)

    obs_dim = 32
    action_dim = 8
    raw_params = init_actor_params(k_params, obs_dim, action_dim)

    # One-time preprocessing (hoisted out of the forward path).
    params_bf16 = prepare_actor_params(raw_params, jnp.bfloat16)   # default path
    params_f32 = prepare_actor_params(raw_params, jnp.float32)     # exactness check

    # ---- tiny-batch inference path (single fused grid step, bf16 MXU) -----
    batch = 8
    obs = jax.random.normal(k_obs, (batch, obs_dim), jnp.float32)
    out = jax.block_until_ready(actor_forward(obs, params_bf16))
    ref_bf = actor_ref_rounded(obs, raw_params, jnp.bfloat16)
    assert out.shape == (batch, action_dim)
    assert jnp.allclose(out, ref_bf, atol=2e-2, rtol=2e-2), "bf16 tiny-batch mismatch"

    # ---- tiny-batch f32 path (exactness of the fused/chunked structure) ---
    out_f32 = jax.block_until_ready(actor_forward(obs, params_f32))
    ref_f32 = actor_ref(obs, raw_params)
    assert jnp.allclose(out_f32, ref_f32, atol=1e-4, rtol=1e-4), "f32 path mismatch"

    # ---- batched path: 2-step grid over batch, bf16 MXU, f32 accumulate ----
    big_batch = 512
    obs_big = jax.random.normal(k_obs_big, (big_batch, obs_dim), jnp.float32)
    out_big = jax.block_until_ready(actor_forward(obs_big, params_bf16))
    ref_big = actor_ref_rounded(obs_big, raw_params, jnp.bfloat16)
    assert out_big.shape == (big_batch, action_dim)
    assert jnp.allclose(out_big, ref_big, atol=2e-2, rtol=2e-2), "bf16 batched mismatch"

    print("KERNEL_OK")
</pallas_src>

<mosaic_0001>
module attributes {stable_mosaic.version = 11 : i64} {
  func.func @actor_kernel(%arg0: i32, %arg1: memref<8x32xf32, #tpu.memory_space<vmem>>, %arg2: memref<32x512xbf16, #tpu.memory_space<vmem>>, %arg3: memref<1x512xf32, #tpu.memory_space<vmem>>, %arg4: memref<512x128xbf16, #tpu.memory_space<vmem>>, %arg5: memref<1x128xf32, #tpu.memory_space<vmem>>, %arg6: memref<128x8xbf16, #tpu.memory_space<vmem>>, %arg7: memref<1x8xf32, #tpu.memory_space<vmem>>, %arg8: memref<8x8xf32, #tpu.memory_space<vmem>>, %arg9: memref<8x128xf32, #tpu.memory_space<vmem>>) attributes {dimension_semantics = [#tpu.dimension_semantics<parallel>], iteration_bounds = array<i64: 1>, scalar_prefetch = 0 : i64, scratch_operands = 1 : i64, tpu.core_type = #tpu.core_type<tc>, window_params = [{transform_indices = @transform_0, window_bounds = array<i64: 8, 32>}, {pipeline_mode = #tpu.pipeline_mode<synchronous>, transform_indices = @transform_1, window_bounds = array<i64: 32, 512>}, {pipeline_mode = #tpu.pipeline_mode<synchronous>, transform_indices = @transform_2, window_bounds = array<i64: 1, 512>}, {pipeline_mode = #tpu.pipeline_mode<synchronous>, transform_indices = @transform_3, window_bounds = array<i64: 512, 128>}, {pipeline_mode = #tpu.pipeline_mode<synchronous>, transform_indices = @transform_4, window_bounds = array<i64: 1, 128>}, {pipeline_mode = #tpu.pipeline_mode<synchronous>, transform_indices = @transform_5, window_bounds = array<i64: 128, 8>}, {pipeline_mode = #tpu.pipeline_mode<synchronous>, transform_indices = @transform_6, window_bounds = array<i64: 1, 8>}, {transform_indices = @transform_7, window_bounds = array<i64: 8, 8>}]} {
    %c0 = arith.constant 0 : index
    %c0_0 = arith.constant 0 : index
    %0 = vector.load %arg1[%c0, %c0_0] : memref<8x32xf32, #tpu.memory_space<vmem>>, vector<8x32xf32>
    %1 = arith.truncf %0 : vector<8x32xf32> to vector<8x32xbf16>
    %cst = arith.constant 0.000000e+00 : f32
    %2 = vector.broadcast %cst : f32 to vector<8x128xf32>
    %c0_1 = arith.constant 0 : index
    %c0_2 = arith.constant 0 : index
    %3 = vector.load %arg9[%c0_1, %c0_2] : memref<8x128xf32, #tpu.memory_space<vmem>>, vector<8x128xf32>
    tpu.vector_store %arg9[%c0_1, %c0_2], %2 {strides = array<i32>} : memref<8x128xf32, #tpu.memory_space<vmem>>, vector<8x128xf32>,
    %c0_i32 = arith.constant 0 : i32
    %c128_i32 = arith.constant 128 : i32
    %4 = arith.muli %c0_i32, %c128_i32 : i32
    %5 = tpu.assume_multiple %4, 128 : i32
    %c0_3 = arith.constant 0 : index
    %6 = arith.index_cast %5 : i32 to index
    %7 = vector.load %arg2[%c0_3, %6] : memref<32x512xbf16, #tpu.memory_space<vmem>>, vector<32x128xbf16>
    %cst_4 = arith.constant dense<0.000000e+00> : vector<8x128xf32>
    %8 = tpu.matmul %1, %7, %cst_4 {dimension_numbers = #tpu.dot_dimension_numbers<[1], [0], [0], [1], [0, 0, 1, 1], [], []>} : vector<8x32xbf16>, vector<32x128xbf16>, vector<8x128xf32> -> vector<8x128xf32>
    %c0_5 = arith.constant 0 : index
    %9 = arith.index_cast %5 : i32 to index
    %10 = vector.load %arg3[%c0_5, %9] : memref<1x512xf32, #tpu.memory_space<vmem>>, vector<1x128xf32>
    %11 = vector.broadcast %10 : vector<1x128xf32> to vector<8x128xf32>
    %12 = arith.addf %8, %11 : vector<8x128xf32>
    %cst_6 = arith.constant 0.000000e+00 : f32
    %13 = vector.broadcast %cst_6 : f32 to vector<8x128xf32>
    %14 = arith.maximumf %12, %13 : vector<8x128xf32>
    %c0_7 = arith.constant 0 : index
    %c0_8 = arith.constant 0 : index
    %15 = vector.load %arg9[%c0_7, %c0_8] : memref<8x128xf32, #tpu.memory_space<vmem>>, vector<8x128xf32>
    %16 = arith.truncf %14 : vector<8x128xf32> to vector<8x128xbf16>
    %17 = arith.index_cast %5 : i32 to index
    %c0_9 = arith.constant 0 : index
    %18 = vector.load %arg4[%17, %c0_9] : memref<512x128xbf16, #tpu.memory_space<vmem>>, vector<128x128xbf16>
    %cst_10 = arith.constant dense<0.000000e+00> : vector<8x128xf32>
    %19 = tpu.matmul %16, %18, %cst_10 {dimension_numbers = #tpu.dot_dimension_numbers<[1], [0], [0], [1], [0, 0, 1, 1], [], []>} : vector<8x128xbf16>, vector<128x128xbf16>, vector<8x128xf32> -> vector<8x128xf32>
    %20 = arith.addf %15, %19 : vector<8x128xf32>
    %c0_11 = arith.constant 0 : index
    %c0_12 = arith.constant 0 : index
    %21 = vector.load %arg9[%c0_11, %c0_12] : memref<8x128xf32, #tpu.memory_space<vmem>>, vector<8x128xf32>
    tpu.vector_store %arg9[%c0_11, %c0_12], %20 {strides = array<i32>} : memref<8x128xf32, #tpu.memory_space<vmem>>, vector<8x128xf32>,
    %c1_i32 = arith.constant 1 : i32
    %c128_i32_13 = arith.constant 128 : i32
    %22 = arith.muli %c1_i32, %c128_i32_13 : i32
    %23 = tpu.assume_multiple %22, 128 : i32
    %c0_14 = arith.constant 0 : index
    %24 = arith.index_cast %23 : i32 to index
    %25 = vector.load %arg2[%c0_14, %24] : memref<32x512xbf16, #tpu.memory_space<vmem>>, vector<32x128xbf16>
    %cst_15 = arith.constant dense<0.000000e+00> : vector<8x128xf32>
    %26 = tpu.matmul %1, %25, %cst_15 {dimension_numbers = #tpu.dot_dimension_numbers<[1], [0], [0], [1], [0, 0, 1, 1], [], []>} : vector<8x32xbf16>, vector<32x128xbf16>, vector<8x128xf32> -> vector<8x128xf32>
    %c0_16 = arith.constant 0 : index
    %27 = arith.index_cast %23 : i32 to index
    %28 = vector.load %arg3[%c0_16, %27] : memref<1x512xf32, #tpu.memory_space<vmem>>, vector<1x128xf32>
    %29 = vector.broadcast %28 : vector<1x128xf32> to vector<8x128xf32>
    %30 = arith.addf %26, %29 : vector<8x128xf32>
    %cst_17 = arith.constant 0.000000e+00 : f32
    %31 = vector.broadcast %cst_17 : f32 to vector<8x128xf32>
    %32 = arith.maximumf %30, %31 : vector<8x128xf32>
    %c0_18 = arith.constant 0 : index
    %c0_19 = arith.constant 0 : index
    %33 = vector.load %arg9[%c0_18, %c0_19] : memref<8x128xf32, #tpu.memory_space<vmem>>, vector<8x128xf32>
    %34 = arith.truncf %32 : vector<8x128xf32> to vector<8x128xbf16>
    %35 = arith.index_cast %23 : i32 to index
    %c0_20 = arith.constant 0 : index
    %36 = vector.load %arg4[%35, %c0_20] : memref<512x128xbf16, #tpu.memory_space<vmem>>, vector<128x128xbf16>
    %cst_21 = arith.constant dense<0.000000e+00> : vector<8x128xf32>
    %37 = tpu.matmul %34, %36, %cst_21 {dimension_numbers = #tpu.dot_dimension_numbers<[1], [0], [0], [1], [0, 0, 1, 1], [], []>} : vector<8x128xbf16>, vector<128x128xbf16>, vector<8x128xf32> -> vector<8x128xf32>
    %38 = arith.addf %33, %37 : vector<8x128xf32>
    %c0_22 = arith.constant 0 : index
    %c0_23 = arith.constant 0 : index
    %39 = vector.load %arg9[%c0_22, %c0_23] : memref<8x128xf32, #tpu.memory_space<vmem>>, vector<8x128xf32>
    tpu.vector_store %arg9[%c0_22, %c0_23], %38 {strides = array<i32>} : memref<8x128xf32, #tpu.memory_space<vmem>>, vector<8x128xf32>,
    %c2_i32 = arith.constant 2 : i32
    %c128_i32_24 = arith.constant 128 : i32
    %40 = arith.muli %c2_i32, %c128_i32_24 : i32
    %41 = tpu.assume_multiple %40, 128 : i32
    %c0_25 = arith.constant 0 : index
    %42 = arith.index_cast %41 : i32 to index
    %43 = vector.load %arg2[%c0_25, %42] : memref<32x512xbf16, #tpu.memory_space<vmem>>, vector<32x128xbf16>
    %cst_26 = arith.constant dense<0.000000e+00> : vector<8x128xf32>
    %44 = tpu.matmul %1, %43, %cst_26 {dimension_numbers = #tpu.dot_dimension_numbers<[1], [0], [0], [1], [0, 0, 1, 1], [], []>} : vector<8x32xbf16>, vector<32x128xbf16>, vector<8x128xf32> -> vector<8x128xf32>
    %c0_27 = arith.constant 0 : index
    %45 = arith.index_cast %41 : i32 to index
    %46 = vector.load %arg3[%c0_27, %45] : memref<1x512xf32, #tpu.memory_space<vmem>>, vector<1x128xf32>
    %47 = vector.broadcast %46 : vector<1x128xf32> to vector<8x128xf32>
    %48 = arith.addf %44, %47 : vector<8x128xf32>
    %cst_28 = arith.constant 0.000000e+00 : f32
    %49 = vector.broadcast %cst_28 : f32 to vector<8x128xf32>
    %50 = arith.maximumf %48, %49 : vector<8x128xf32>
    %c0_29 = arith.constant 0 : index
    %c0_30 = arith.constant 0 : index
    %51 = vector.load %arg9[%c0_29, %c0_30] : memref<8x128xf32, #tpu.memory_space<vmem>>, vector<8x128xf32>
    %52 = arith.truncf %50 : vector<8x128xf32> to vector<8x128xbf16>
    %53 = arith.index_cast %41 : i32 to index
    %c0_31 = arith.constant 0 : index
    %54 = vector.load %arg4[%53, %c0_31] : memref<512x128xbf16, #tpu.memory_space<vmem>>, vector<128x128xbf16>
    %cst_32 = arith.constant dense<0.000000e+00> : vector<8x128xf32>
    %55 = tpu.matmul %52, %54, %cst_32 {dimension_numbers = #tpu.dot_dimension_numbers<[1], [0], [0], [1], [0, 0, 1, 1], [], []>} : vector<8x128xbf16>, vector<128x128xbf16>, vector<8x128xf32> -> vector<8x128xf32>
    %56 = arith.addf %51, %55 : vector<8x128xf32>
    %c0_33 = arith.constant 0 : index
    %c0_34 = arith.constant 0 : index
    %57 = vector.load %arg9[%c0_33, %c0_34] : memref<8x128xf32, #tpu.memory_space<vmem>>, vector<8x128xf32>
    tpu.vector_store %arg9[%c0_33, %c0_34], %56 {strides = array<i32>} : memref<8x128xf32, #tpu.memory_space<vmem>>, vector<8x128xf32>,
    %c3_i32 = arith.constant 3 : i32
    %c128_i32_35 = arith.constant 128 : i32
    %58 = arith.muli %c3_i32, %c128_i32_35 : i32
    %59 = tpu.assume_multiple %58, 128 : i32
    %c0_36 = arith.constant 0 : index
    %60 = arith.index_cast %59 : i32 to index
    %61 = vector.load %arg2[%c0_36, %60] : memref<32x512xbf16, #tpu.memory_space<vmem>>, vector<32x128xbf16>
    %cst_37 = arith.constant dense<0.000000e+00> : vector<8x128xf32>
    %62 = tpu.matmul %1, %61, %cst_37 {dimension_numbers = #tpu.dot_dimension_numbers<[1], [0], [0], [1], [0, 0, 1, 1], [], []>} : vector<8x32xbf16>, vector<32x128xbf16>, vector<8x128xf32> -> vector<8x128xf32>
    %c0_38 = arith.constant 0 : index
    %63 = arith.index_cast %59 : i32 to index
    %64 = vector.load %arg3[%c0_38, %63] : memref<1x512xf32, #tpu.memory_space<vmem>>, vector<1x128xf32>
    %65 = vector.broadcast %64 : vector<1x128xf32> to vector<8x128xf32>
    %66 = arith.addf %62, %65 : vector<8x128xf32>
    %cst_39 = arith.constant 0.000000e+00 : f32
    %67 = vector.broadcast %cst_39 : f32 to vector<8x128xf32>
    %68 = arith.maximumf %66, %67 : vector<8x128xf32>
    %c0_40 = arith.constant 0 : index
    %c0_41 = arith.constant 0 : index
    %69 = vector.load %arg9[%c0_40, %c0_41] : memref<8x128xf32, #tpu.memory_space<vmem>>, vector<8x128xf32>
    %70 = arith.truncf %68 : vector<8x128xf32> to vector<8x128xbf16>
    %71 = arith.index_cast %59 : i32 to index
    %c0_42 = arith.constant 0 : index
    %72 = vector.load %arg4[%71, %c0_42] : memref<512x128xbf16, #tpu.memory_space<vmem>>, vector<128x128xbf16>
    %cst_43 = arith.constant dense<0.000000e+00> : vector<8x128xf32>
    %73 = tpu.matmul %70, %72, %cst_43 {dimension_numbers = #tpu.dot_dimension_numbers<[1], [0], [0], [1], [0, 0, 1, 1], [], []>} : vector<8x128xbf16>, vector<128x128xbf16>, vector<8x128xf32> -> vector<8x128xf32>
    %74 = arith.addf %69, %73 : vector<8x128xf32>
    %c0_44 = arith.constant 0 : index
    %c0_45 = arith.constant 0 : index
    %75 = vector.load %arg9[%c0_44, %c0_45] : memref<8x128xf32, #tpu.memory_space<vmem>>, vector<8x128xf32>
    tpu.vector_store %arg9[%c0_44, %c0_45], %74 {strides = array<i32>} : memref<8x128xf32, #tpu.memory_space<vmem>>, vector<8x128xf32>,
    %c4_i32 = arith.constant 4 : i32
    %c0_46 = arith.constant 0 : index
    %c0_47 = arith.constant 0 : index
    %76 = vector.load %arg9[%c0_46, %c0_47] : memref<8x128xf32, #tpu.memory_space<vmem>>, vector<8x128xf32>
    %c0_48 = arith.constant 0 : index
    %c0_49 = arith.constant 0 : index
    %77 = vector.load %arg5[%c0_48, %c0_49] : memref<1x128xf32, #tpu.memory_space<vmem>>, vector<1x128xf32>
    %78 = vector.broadcast %77 : vector<1x128xf32> to vector<8x128xf32>
    %79 = arith.addf %76, %78 : vector<8x128xf32>
    %cst_50 = arith.constant 0.000000e+00 : f32
    %80 = vector.broadcast %cst_50 : f32 to vector<8x128xf32>
    %81 = arith.maximumf %79, %80 : vector<8x128xf32>
    %82 = arith.truncf %81 : vector<8x128xf32> to vector<8x128xbf16>
    %c0_51 = arith.constant 0 : index
    %c0_52 = arith.constant 0 : index
    %83 = vector.load %arg6[%c0_51, %c0_52] : memref<128x8xbf16, #tpu.memory_space<vmem>>, vector<128x8xbf16>
    %cst_53 = arith.constant dense<0.000000e+00> : vector<8x8xf32>
    %84 = tpu.matmul %82, %83, %cst_53 {dimension_numbers = #tpu.dot_dimension_numbers<[1], [0], [0], [1], [0, 0, 1, 1], [], []>} : vector<8x128xbf16>, vector<128x8xbf16>, vector<8x8xf32> -> vector<8x8xf32>
    %c0_54 = arith.constant 0 : index
    %c0_55 = arith.constant 0 : index
    %85 = vector.load %arg7[%c0_54, %c0_55] : memref<1x8xf32, #tpu.memory_space<vmem>>, vector<1x8xf32>
    %86 = vector.broadcast %85 : vector<1x8xf32> to vector<8x8xf32>
    %87 = arith.addf %84, %86 : vector<8x8xf32>
    %88 = math.tanh %87 : vector<8x8xf32>
    %c0_56 = arith.constant 0 : index
    %c0_57 = arith.constant 0 : index
    %89 = vector.load %arg8[%c0_56, %c0_57] : memref<8x8xf32, #tpu.memory_space<vmem>>, vector<8x8xf32>
    tpu.vector_store %arg8[%c0_56, %c0_57], %88 {strides = array<i32>} : memref<8x8xf32, #tpu.memory_space<vmem>>, vector<8x8xf32>,
    return
  }
  func.func @transform_0(%arg0: i32) -> (i32, i32) {
    %c0_i32 = arith.constant 0 : i32
    %c0_i32_0 = arith.constant 0 : i32
    return %arg0, %c0_i32 : i32, i32
  }
  func.func @transform_1(%arg0: i32) -> (i32, i32) {
    %c0_i32 = arith.constant 0 : i32
    %c0_i32_0 = arith.constant 0 : i32
    %c0_i32_1 = arith.constant 0 : i32
    return %c0_i32, %c0_i32_0 : i32, i32
  }
  func.func @transform_2(%arg0: i32) -> (i32, i32) {
    %c0_i32 = arith.constant 0 : i32
    %c0_i32_0 = arith.constant 0 : i32
    %c0_i32_1 = arith.constant 0 : i32
    return %c0_i32, %c0_i32_0 : i32, i32
  }
  func.func @transform_3(%arg0: i32) -> (i32, i32) {
    %c0_i32 = arith.constant 0 : i32
    %c0_i32_0 = arith.constant 0 : i32
    %c0_i32_1 = arith.constant 0 : i32
    return %c0_i32, %c0_i32_0 : i32, i32
  }
  func.func @transform_4(%arg0: i32) -> (i32, i32) {
    %c0_i32 = arith.constant 0 : i32
    %c0_i32_0 = arith.constant 0 : i32
    %c0_i32_1 = arith.constant 0 : i32
    return %c0_i32, %c0_i32_0 : i32, i32
  }
  func.func @transform_5(%arg0: i32) -> (i32, i32) {
    %c0_i32 = arith.constant 0 : i32
    %c0_i32_0 = arith.constant 0 : i32
    %c0_i32_1 = arith.constant 0 : i32
    return %c0_i32, %c0_i32_0 : i32, i32
  }
  func.func @transform_6(%arg0: i32) -> (i32, i32) {
    %c0_i32 = arith.constant 0 : i32
    %c0_i32_0 = arith.constant 0 : i32
    %c0_i32_1 = arith.constant 0 : i32
    return %c0_i32, %c0_i32_0 : i32, i32
  }
  func.func @transform_7(%arg0: i32) -> (i32, i32) {
    %c0_i32 = arith.constant 0 : i32
    %c0_i32_0 = arith.constant 0 : i32
    return %arg0, %c0_i32 : i32, i32
  }
}

</mosaic_0001>

<llo_original>
// kernel: tpu_custom_call.1
$region0: #{tpu_custom_call.1}
  #allocation0 [shape = 'u32[]', space=smem, size = 0x4, offset = 0x4, fixed_abs, tag = 'smem constant byte address 0x4 - core index']
  #allocation1 [shape = 'u32[144,128]{1,0:T(1,128)}', space=vmem, size = 0x12000, scoped, tag = 'internal scratch']
  #allocation2 [shape = 'f32[8,128]{1,0:T(8,128)}', space=vmem, size = 0x1000, scoped, tag = 'scratch operand']
  %s0 = inlined_call_operand.hbm [shape: f32[8,32], index: 0, kind: input, shape index: {}]
  %s1 = inlined_call_operand.vmem [shape: bf16[32,512], index: 1, kind: input, shape index: {}]
  %s2 = inlined_call_operand.vmem [shape: f32[1,512], index: 2, kind: input, shape index: {}]
  %s3 = inlined_call_operand.hbm [shape: bf16[512,128], index: 3, kind: input, shape index: {}]
  %s4 = inlined_call_operand.vmem [shape: f32[1,128], index: 4, kind: input, shape index: {}]
  %s5 = inlined_call_operand.vmem [shape: bf16[128,8], index: 5, kind: input, shape index: {}]
  %s6 = inlined_call_operand.vmem [shape: f32[1,8], index: 6, kind: input, shape index: {}]
  %s7 = inlined_call_operand.hbm [shape: f32[8,8], index: 7, kind: output, shape index: {}]
  %s8 = sld [smem:[#allocation0]]
  $region46: #{tpu_custom_call.1} parent=0
    _
  %s10 = ssub.s32 1, %s8
  %s11 = scalar_select 0, %s10, %s8
  $region1: #{tpu_custom_call.1} parent=0
    #allocation3 [shape = 'u8[4096]{0}', space=vmem, size = 0x1000, scoped, tag = 'input window, operand 0, single buffered']
    #allocation4 [shape = 's32[1]{0}', space=sflag, size = 0x4, scoped, tag = 'scoped memory for tpu_custom_call.1']
    #allocation5 [shape = 's32[1]{0}', space=sflag, size = 0x4, scoped, tag = 'scoped memory for tpu_custom_call.1']
    #allocation6 [shape = 'u8[131072]{0}', space=vmem, size = 0x20000, scoped, tag = 'input window, operand 3, single buffered']
    #allocation7 [shape = 's32[1]{0}', space=sflag, size = 0x4, scoped, tag = 'scoped memory for tpu_custom_call.1']
    #allocation8 [shape = 'u8[4096]{0}', space=vmem, size = 0x1000, scoped, tag = 'output window, operand 0, single buffered']
    %12 = vsyncpa [#allocation4], 0
    %13 = vsyncpa [#allocation7], 0
    %14 = vsyncpa [#allocation5], 0
    // Predicated region
    $region2: #{tpu_custom_call.1} parent=1 // pred_check
      _
    $region3: #{tpu_custom_call.1} parent=1 // pred_check_branch
      %16 = sbr.rel (0) target = $region5
    $region4: #{tpu_custom_call.1} parent=1 // pred_region
      %s18 = ssub.s32 128, 128
      %19 = vsyncadd [#allocation4], %s18
      %s21 = sshll.u32 [#allocation3], 4
      %s22 = int_to_ptr.vmem [resolvable:$true] %s21
      %24 = dma.hbm_to_vmem [thread:$0]  %s0, 128, %s22, [#allocation4]
    $region5: #{tpu_custom_call.1} parent=1 // pred_fallthru
      _
    // Predicated region
    $region6: #{tpu_custom_call.1} parent=1 // pred_check
      _
    $region7: #{tpu_custom_call.1} parent=1 // pred_check_branch
      %26 = sbr.rel (0) target = $region9
    $region8: #{tpu_custom_call.1} parent=1 // pred_region
      _
    $region9: #{tpu_custom_call.1} parent=1 // pred_fallthru
      _
    // Predicated region
    $region10: #{tpu_custom_call.1} parent=1 // pred_check
      _
    $region11: #{tpu_custom_call.1} parent=1 // pred_check_branch
      %28 = sbr.rel (0) target = $region13
    $region12: #{tpu_custom_call.1} parent=1 // pred_region
      _
    $region13: #{tpu_custom_call.1} parent=1 // pred_fallthru
      _
    // Predicated region
    $region14: #{tpu_custom_call.1} parent=1 // pred_check
      _
    $region15: #{tpu_custom_call.1} parent=1 // pred_check_branch
      %30 = sbr.rel (0) target = $region17
    $region16: #{tpu_custom_call.1} parent=1 // pred_region
      %s32 = ssub.s32 4096, 4096
      %33 = vsyncadd [#allocation7], %s32
      %s34 = sshll.u32 [#allocation6], 4
      %s35 = int_to_ptr.vmem [resolvable:$true] %s34
      %40 = dma.hbm_to_vmem [thread:$0]  %s3, 4096, %s35, [#allocation7], 64, 64, 4
    $region17: #{tpu_custom_call.1} parent=1 // pred_fallthru
      _
    // Predicated region
    $region18: #{tpu_custom_call.1} parent=1 // pred_check
      _
    $region19: #{tpu_custom_call.1} parent=1 // pred_check_branch
      %42 = sbr.rel (0) target = $region21
    $region20: #{tpu_custom_call.1} parent=1 // pred_region
      _
    $region21: #{tpu_custom_call.1} parent=1 // pred_fallthru
      _
    // Predicated region
    $region22: #{tpu_custom_call.1} parent=1 // pred_check
      _
    $region23: #{tpu_custom_call.1} parent=1 // pred_check_branch
      %44 = sbr.rel (0) target = $region25
    $region24: #{tpu_custom_call.1} parent=1 // pred_region
      _
    $region25: #{tpu_custom_call.1} parent=1 // pred_fallthru
      _
    // Predicated region
    $region26: #{tpu_custom_call.1} parent=1 // pred_check
      _
    $region27: #{tpu_custom_call.1} parent=1 // pred_check_branch
      %46 = sbr.rel (0) target = $region29
    $region28: #{tpu_custom_call.1} parent=1 // pred_region
      _
    $region29: #{tpu_custom_call.1} parent=1 // pred_fallthru
      _
    // Predicated region
    $region30: #{tpu_custom_call.1} parent=1 // pred_check
      _
    $region31: #{tpu_custom_call.1} parent=1 // pred_check_branch
      %48 = sbr.rel (0) target = $region33
    $region32: #{tpu_custom_call.1} parent=1 // pred_region
      %49 = dma.done [#allocation4], 128
    $region33: #{tpu_custom_call.1} parent=1 // pred_fallthru
      _
    // Predicated region
    $region34: #{tpu_custom_call.1} parent=1 // pred_check
      _
    $region35: #{tpu_custom_call.1} parent=1 // pred_check_branch
      %51 = sbr.rel (0) target = $region37
    $region36: #{tpu_custom_call.1} parent=1 // pred_region
      %52 = dma.done [#allocation7], 4096
    $region37: #{tpu_custom_call.1} parent=1 // pred_fallthru
      _
    %v54 = vld [vmem:[#allocation3] sm:$0xff]
    %v55 = vpack.c.bf16 %v54, %v54
    %56 = vst [vmem:[#allocation2] sm:$0xff] 0.0
    %v57 = vld [vmem:[%s1] sm:$0xf]
    %v58 = vld [vmem:[%s1 + $0x10] sm:$0xf]
    %v59 = vld [vmem:[%s1 + $0x20] sm:$0xf]
    %v60 = vld [vmem:[%s1 + $0x30] sm:$0xf]
    %v61 = vld [vmem:[%s2] sm:$0x1]
    %v63 = vlaneseq
    %v64 = vshrl.u32 %v63, 7
    %v65 = vsub.s32 0, %v64
    %v66 = vrot.slane %v61, %v65
    %v72 = vunpack.c.l.b16 %v57
    %v73 = vunpack.c.l.b16 %v58
    %v74 = vunpack.c.l.b16 %v59
    %v75 = vunpack.c.l.b16 %v60
    %v76 = vpack.c.b16 %v73, %v72
    %v77 = vpack.c.b16 %v75, %v74
    %vm80 = vcmask 261120
    %v82 = vsel %vm80, %v55, 0
    %84 = vmatprep.subr.bf16.mxu0 0
    %85 = vmatpush1.bf16.msra.mxu0 0
    %86 = vmatprep.subr.bf16.mxu0 0
    %87 = vmatpush1.bf16.msra.mxu0 0
    %88 = vmatprep.subr.bf16.mxu0 0
    %89 = vmatpush1.bf16.msra.mxu0 0
    %90 = vmatprep.subr.bf16.mxu0 0
    %91 = vmatpush1.bf16.msra.mxu0 0
    %92 = vmatprep.subr.bf16.mxu0 0
    %93 = vmatpush1.bf16.msra.mxu0 0
    %94 = vmatprep.subr.bf16.mxu0 0
    %95 = vmatpush1.bf16.msra.mxu0 0
    %96 = vmatprep.subr.bf16.mxu0 0
    %97 = vmatpush1.bf16.msra.mxu0 %v77
    %98 = vmatprep.subr.bf16.mxu0 0
    %99 = vmatpush1.bf16.msra.mxu0 %v76
    %100 = vmatprep.subr.bf16.mxu0 0
    %101 = vmatpush2.bf16.msra.mxu0 0
    %102 = vmatprep.subr.bf16.mxu0 0
    %103 = vmatpush2.bf16.msra.mxu0 0
    %104 = vmatprep.subr.bf16.mxu0 0
    %105 = vmatpush2.bf16.msra.mxu0 0
    %106 = vmatprep.subr.bf16.mxu0 0
    %107 = vmatpush2.bf16.msra.mxu0 0
    %108 = vmatprep.subr.bf16.mxu0 0
    %109 = vmatpush2.bf16.msra.mxu0 0
    %110 = vmatprep.subr.bf16.mxu0 0
    %111 = vmatpush2.bf16.msra.mxu0 0
    %112 = vmatprep.subr.bf16.mxu0 0
    %113 = vmatpush2.bf16.msra.mxu0 0
    %114 = vmatprep.subr.bf16.mxu0 0
    %115 = vmatpush2.bf16.msra.mxu0 0
    %116 = vmatprep.mubr.bf16.mxu0 0
    %117 = vmatmul.mubr.bf16.gmra.mxu0 %v82
    %v118 = vpop.f32.mrf.mxu0
    %v119 = vadd.f32 %v66, %v118
    %v120 = vpop.f32.mrf.mxu0
    %v121 = vpop.f32.mrf.mxu0
    %v122 = vpop.f32.mrf.mxu0
    %123 = vdwg.mxu0
    %v124 = vmax.f32 %v119, 0.0
    %v125 = vld [vmem:[#allocation2] sm:$0xff]
    %v126 = vpack.c.bf16 %v124, %v124
    %v127 = vld [vmem:[#allocation6] sm:$0xf]
    %v128 = vld [vmem:[#allocation6 + $0x4] sm:$0xf]
    %v129 = vld [vmem:[#allocation6 + $0x8] sm:$0xf]
    %v130 = vld [vmem:[#allocation6 + $0xc] sm:$0xf]
    %v131 = vld [vmem:[#allocation6 + $0x10] sm:$0xf]
    %v132 = vld [vmem:[#allocation6 + $0x14] sm:$0xf]
    %v133 = vld [vmem:[#allocation6 + $0x18] sm:$0xf]
    %v134 = vld [vmem:[#allocation6 + $0x1c] sm:$0xf]
    %v135 = vld [vmem:[#allocation6 + $0x20] sm:$0xf]
    %v136 = vld [vmem:[#allocation6 + $0x24] sm:$0xf]
    %v137 = vld [vmem:[#allocation6 + $0x28] sm:$0xf]
    %v138 = vld [vmem:[#allocation6 + $0x2c] sm:$0xf]
    %v139 = vld [vmem:[#allocation6 + $0x30] sm:$0xf]
    %v140 = vld [vmem:[#allocation6 + $0x34] sm:$0xf]
    %v141 = vld [vmem:[#allocation6 + $0x38] sm:$0xf]
    %v142 = vld [vmem:[#allocation6 + $0x3c] sm:$0xf]
    %v159 = vunpack.c.l.b16 %v127
    %v160 = vunpack.c.l.b16 %v128
    %v161 = vunpack.c.l.b16 %v129
    %v162 = vunpack.c.l.b16 %v130
    %v163 = vunpack.c.l.b16 %v131
    %v164 = vunpack.c.l.b16 %v132
    %v165 = vunpack.c.l.b16 %v133
    %v166 = vunpack.c.l.b16 %v134
    %v167 = vunpack.c.l.b16 %v135
    %v168 = vunpack.c.l.b16 %v136
    %v169 = vunpack.c.l.b16 %v137
    %v170 = vunpack.c.l.b16 %v138
    %v171 = vunpack.c.l.b16 %v139
    %v172 = vunpack.c.l.b16 %v140
    %v173 = vunpack.c.l.b16 %v141
    %v174 = vunpack.c.l.b16 %v142
    %v175 = vpack.c.b16 %v160, %v159
    %v176 = vpack.c.b16 %v162, %v161
    %v177 = vpack.c.b16 %v164, %v163
    %v178 = vpack.c.b16 %v166, %v165
    %v179 = vpack.c.b16 %v168, %v167
    %v180 = vpack.c.b16 %v170, %v169
    %v181 = vpack.c.b16 %v172, %v171
    %v182 = vpack.c.b16 %v174, %v173
    %191 = vmatprep.subr.bf16.mxu0 0
    %192 = vmatpush1.bf16.msra.mxu0 %v182
    %193 = vmatprep.subr.bf16.mxu0 0
    %194 = vmatpush1.bf16.msra.mxu0 %v181
    %195 = vmatprep.subr.bf16.mxu0 0
    %196 = vmatpush1.bf16.msra.mxu0 %v180
    %197 = vmatprep.subr.bf16.mxu0 0
    %198 = vmatpush1.bf16.msra.mxu0 %v179
    %199 = vmatprep.subr.bf16.mxu0 0
    %200 = vmatpush1.bf16.msra.mxu0 %v178
    %201 = vmatprep.subr.bf16.mxu0 0
    %202 = vmatpush1.bf16.msra.mxu0 %v177
    %203 = vmatprep.subr.bf16.mxu0 0
    %204 = vmatpush1.bf16.msra.mxu0 %v176
    %205 = vmatprep.subr.bf16.mxu0 0
    %206 = vmatpush1.bf16.msra.mxu0 %v175
    %207 = vmatprep.subr.bf16.mxu0 0
    %208 = vmatpush2.bf16.msra.mxu0 0
    %209 = vmatprep.subr.bf16.mxu0 0
    %210 = vmatpush2.bf16.msra.mxu0 0
    %211 = vmatprep.subr.bf16.mxu0 0
    %212 = vmatpush2.bf16.msra.mxu0 0
    %213 = vmatprep.subr.bf16.mxu0 0
    %214 = vmatpush2.bf16.msra.mxu0 0
    %215 = vmatprep.subr.bf16.mxu0 0
    %216 = vmatpush2.bf16.msra.mxu0 0
    %217 = vmatprep.subr.bf16.mxu0 0
    %218 = vmatpush2.bf16.msra.mxu0 0
    %219 = vmatprep.subr.bf16.mxu0 0
    %220 = vmatpush2.bf16.msra.mxu0 0
    %221 = vmatprep.subr.bf16.mxu0 0
    %222 = vmatpush2.bf16.msra.mxu0 0
    %223 = vmatprep.mubr.bf16.mxu0 0
    %224 = vmatmul.mubr.bf16.gmra.mxu0 %v126
    %v225 = vpop.f32.mrf.mxu0
    %v226 = vadd.f32 0.0, %v225
    %v227 = vpop.f32.mrf.mxu0
    %v228 = vpop.f32.mrf.mxu0
    %v229 = vpop.f32.mrf.mxu0
    %230 = vdwg.mxu0
    %v231 = vadd.f32 %v125, %v226
    %232 = vst [vmem:[#allocation2] sm:$0xff] %v231
    %s233 = scalar_lea.vmem %s1, 4
    %v234 = vld [vmem:[%s233] sm:$0xf]
    %v235 = vld [vmem:[%s233 + $0x10] sm:$0xf]
    %v236 = vld [vmem:[%s233 + $0x20] sm:$0xf]
    %v237 = vld [vmem:[%s233 + $0x30] sm:$0xf]
    %s238 = scalar_lea.vmem %s2, 1
    %v239 = vld [vmem:[%s238] sm:$0x1]
    %v241 = vlaneseq
    %v242 = vshrl.u32 %v241, 7
    %v243 = vsub.s32 0, %v242
    %v244 = vrot.slane %v239, %v243
    %v250 = vunpack.c.l.b16 %v234
    %v251 = vunpack.c.l.b16 %v235
    %v252 = vunpack.c.l.b16 %v236
    %v253 = vunpack.c.l.b16 %v237
    %v254 = vpack.c.b16 %v251, %v250
    %v255 = vpack.c.b16 %v253, %v252
    %258 = vmatprep.subr.bf16.mxu0 0
    %259 = vmatpush1.bf16.msra.mxu0 0
    %260 = vmatprep.subr.bf16.mxu0 0
    %261 = vmatpush1.bf16.msra.mxu0 0
    %262 = vmatprep.subr.bf16.mxu0 0
    %263 = vmatpush1.bf16.msra.mxu0 0
    %264 = vmatprep.subr.bf16.mxu0 0
    %265 = vmatpush1.bf16.msra.mxu0 0
    %266 = vmatprep.subr.bf16.mxu0 0
    %267 = vmatpush1.bf16.msra.mxu0 0
    %268 = vmatprep.subr.bf16.mxu0 0
    %269 = vmatpush1.bf16.msra.mxu0 0
    %270 = vmatprep.subr.bf16.mxu0 0
    %271 = vmatpush1.bf16.msra.mxu0 %v255
    %272 = vmatprep.subr.bf16.mxu0 0
    %273 = vmatpush1.bf16.msra.mxu0 %v254
    %274 = vmatprep.subr.bf16.mxu0 0
    %275 = vmatpush2.bf16.msra.mxu0 0
    %276 = vmatprep.subr.bf16.mxu0 0
    %277 = vmatpush2.bf16.msra.mxu0 0
    %278 = vmatprep.subr.bf16.mxu0 0
    %279 = vmatpush2.bf16.msra.mxu0 0
    %280 = vmatprep.subr.bf16.mxu0 0
    %281 = vmatpush2.bf16.msra.mxu0 0
    %282 = vmatprep.subr.bf16.mxu0 0
    %283 = vmatpush2.bf16.msra.mxu0 0
    %284 = vmatprep.subr.bf16.mxu0 0
    %285 = vmatpush2.bf16.msra.mxu0 0
    %286 = vmatprep.subr.bf16.mxu0 0
    %287 = vmatpush2.bf16.msra.mxu0 0
    %288 = vmatprep.subr.bf16.mxu0 0
    %289 = vmatpush2.bf16.msra.mxu0 0
    %290 = vmatprep.mubr.bf16.mxu0 0
    %291 = vmatmul.mubr.bf16.gmra.mxu0 %v82
    %v292 = vpop.f32.mrf.mxu0
    %v293 = vadd.f32 %v244, %v292
    %v294 = vpop.f32.mrf.mxu0
    %v295 = vpop.f32.mrf.mxu0
    %v296 = vpop.f32.mrf.mxu0
    %297 = vdwg.mxu0
    %v298 = vmax.f32 %v293, 0.0
    %v299 = vld [vmem:[#allocation2] sm:$0xff]
    %v300 = vpack.c.bf16 %v298, %v298
    %s301 = scalar_lea.vmem [#allocation6], 64
    %v302 = vld [vmem:[%s301] sm:$0xf]
    %v303 = vld [vmem:[%s301 + $0x4] sm:$0xf]
    %v304 = vld [vmem:[%s301 + $0x8] sm:$0xf]
    %v305 = vld [vmem:[%s301 + $0xc] sm:$0xf]
    %v306 = vld [vmem:[%s301 + $0x10] sm:$0xf]
    %v307 = vld [vmem:[%s301 + $0x14] sm:$0xf]
    %v308 = vld [vmem:[%s301 + $0x18] sm:$0xf]
    %v309 = vld [vmem:[%s301 + $0x1c] sm:$0xf]
    %v310 = vld [vmem:[%s301 + $0x20] sm:$0xf]
    %v311 = vld [vmem:[%s301 + $0x24] sm:$0xf]
    %v312 = vld [vmem:[%s301 + $0x28] sm:$0xf]
    %v313 = vld [vmem:[%s301 + $0x2c] sm:$0xf]
    %v314 = vld [vmem:[%s301 + $0x30] sm:$0xf]
    %v315 = vld [vmem:[%s301 + $0x34] sm:$0xf]
    %v316 = vld [vmem:[%s301 + $0x38] sm:$0xf]
    %v317 = vld [vmem:[%s301 + $0x3c] sm:$0xf]
    %v334 = vunpack.c.l.b16 %v302
    %v335 = vunpack.c.l.b16 %v303
    %v336 = vunpack.c.l.b16 %v304
    %v337 = vunpack.c.l.b16 %v305
    %v338 = vunpack.c.l.b16 %v306
    %v339 = vunpack.c.l.b16 %v307
    %v340 = vunpack.c.l.b16 %v308
    %v341 = vunpack.c.l.b16 %v309
    %v342 = vunpack.c.l.b16 %v310
    %v343 = vunpack.c.l.b16 %v311
    %v344 = vunpack.c.l.b16 %v312
    %v345 = vunpack.c.l.b16 %v313
    %v346 = vunpack.c.l.b16 %v314
    %v347 = vunpack.c.l.b16 %v315
    %v348 = vunpack.c.l.b16 %v316
    %v349 = vunpack.c.l.b16 %v317
    %v350 = vpack.c.b16 %v335, %v334
    %v351 = vpack.c.b16 %v337, %v336
    %v352 = vpack.c.b16 %v339, %v338
    %v353 = vpack.c.b16 %v341, %v340
    %v354 = vpack.c.b16 %v343, %v342
    %v355 = vpack.c.b16 %v345, %v344
    %v356 = vpack.c.b16 %v347, %v346
    %v357 = vpack.c.b16 %v349, %v348
    %366 = vmatprep.subr.bf16.mxu0 0
    %367 = vmatpush1.bf16.msra.mxu0 %v357
    %368 = vmatprep.subr.bf16.mxu0 0
    %369 = vmatpush1.bf16.msra.mxu0 %v356
    %370 = vmatprep.subr.bf16.mxu0 0
    %371 = vmatpush1.bf16.msra.mxu0 %v355
    %372 = vmatprep.subr.bf16.mxu0 0
    %373 = vmatpush1.bf16.msra.mxu0 %v354
    %374 = vmatprep.subr.bf16.mxu0 0
    %375 = vmatpush1.bf16.msra.mxu0 %v353
    %376 = vmatprep.subr.bf16.mxu0 0
    %377 = vmatpush1.bf16.msra.mxu0 %v352
    %378 = vmatprep.subr.bf16.mxu0 0
    %379 = vmatpush1.bf16.msra.mxu0 %v351
    %380 = vmatprep.subr.bf16.mxu0 0
    %381 = vmatpush1.bf16.msra.mxu0 %v350
    %382 = vmatprep.subr.bf16.mxu0 0
    %383 = vmatpush2.bf16.msra.mxu0 0
    %384 = vmatprep.subr.bf16.mxu0 0
    %385 = vmatpush2.bf16.msra.mxu0 0
    %386 = vmatprep.subr.bf16.mxu0 0
    %387 = vmatpush2.bf16.msra.mxu0 0
    %388 = vmatprep.subr.bf16.mxu0 0
    %389 = vmatpush2.bf16.msra.mxu0 0
    %390 = vmatprep.subr.bf16.mxu0 0
    %391 = vmatpush2.bf16.msra.mxu0 0
    %392 = vmatprep.subr.bf16.mxu0 0
    %393 = vmatpush2.bf16.msra.mxu0 0
    %394 = vmatprep.subr.bf16.mxu0 0
    %395 = vmatpush2.bf16.msra.mxu0 0
    %396 = vmatprep.subr.bf16.mxu0 0
    %397 = vmatpush2.bf16.msra.mxu0 0
    %398 = vmatprep.mubr.bf16.mxu0 0
    %399 = vmatmul.mubr.bf16.gmra.mxu0 %v300
    %v400 = vpop.f32.mrf.mxu0
    %v401 = vadd.f32 0.0, %v400
    %v402 = vpop.f32.mrf.mxu0
    %v403 = vpop.f32.mrf.mxu0
    %v404 = vpop.f32.mrf.mxu0
    %405 = vdwg.mxu0
    %v406 = vadd.f32 %v299, %v401
    %407 = vst [vmem:[#allocation2] sm:$0xff] %v406
    %s408 = scalar_lea.vmem %s1, 8
    %v409 = vld [vmem:[%s408] sm:$0xf]
    %v410 = vld [vmem:[%s408 + $0x10] sm:$0xf]
    %v411 = vld [vmem:[%s408 + $0x20] sm:$0xf]
    %v412 = vld [vmem:[%s408 + $0x30] sm:$0xf]
    %s413 = scalar_lea.vmem %s2, 2
    %v414 = vld [vmem:[%s413] sm:$0x1]
    %v416 = vlaneseq
    %v417 = vshrl.u32 %v416, 7
    %v418 = vsub.s32 0, %v417
    %v419 = vrot.slane %v414, %v418
    %v425 = vunpack.c.l.b16 %v409
    %v426 = vunpack.c.l.b16 %v410
    %v427 = vunpack.c.l.b16 %v411
    %v428 = vunpack.c.l.b16 %v412
    %v429 = vpack.c.b16 %v426, %v425
    %v430 = vpack.c.b16 %v428, %v427
    %433 = vmatprep.subr.bf16.mxu0 0
    %434 = vmatpush1.bf16.msra.mxu0 0
    %435 = vmatprep.subr.bf16.mxu0 0
    %436 = vmatpush1.bf16.msra.mxu0 0
    %437 = vmatprep.subr.bf16.mxu0 0
    %438 = vmatpush1.bf16.msra.mxu0 0
    %439 = vmatprep.subr.bf16.mxu0 0
    %440 = vmatpush1.bf16.msra.mxu0 0
    %441 = vmatprep.subr.bf16.mxu0 0
    %442 = vmatpush1.bf16.msra.mxu0 0
    %443 = vmatprep.subr.bf16.mxu0 0
    %444 = vmatpush1.bf16.msra.mxu0 0
    %445 = vmatprep.subr.bf16.mxu0 0
    %446 = vmatpush1.bf16.msra.mxu0 %v430
    %447 = vmatprep.subr.bf16.mxu0 0
    %448 = vmatpush1.bf16.msra.mxu0 %v429
    %449 = vmatprep.subr.bf16.mxu0 0
    %450 = vmatpush2.bf16.msra.mxu0 0
    %451 = vmatprep.subr.bf16.mxu0 0
    %452 = vmatpush2.bf16.msra.mxu0 0
    %453 = vmatprep.subr.bf16.mxu0 0
    %454 = vmatpush2.bf16.msra.mxu0 0
    %455 = vmatprep.subr.bf16.mxu0 0
    %456 = vmatpush2.bf16.msra.mxu0 0
    %457 = vmatprep.subr.bf16.mxu0 0
    %458 = vmatpush2.bf16.msra.mxu0 0
    %459 = vmatprep.subr.bf16.mxu0 0
    %460 = vmatpush2.bf16.msra.mxu0 0
    %461 = vmatprep.subr.bf16.mxu0 0
    %462 = vmatpush2.bf16.msra.mxu0 0
    %463 = vmatprep.subr.bf16.mxu0 0
    %464 = vmatpush2.bf16.msra.mxu0 0
    %465 = vmatprep.mubr.bf16.mxu0 0
    %466 = vmatmul.mubr.bf16.gmra.mxu0 %v82
    %v467 = vpop.f32.mrf.mxu0
    %v468 = vadd.f32 %v419, %v467
    %v469 = vpop.f32.mrf.mxu0
    %v470 = vpop.f32.mrf.mxu0
    %v471 = vpop.f32.mrf.mxu0
    %472 = vdwg.mxu0
    %v473 = vmax.f32 %v468, 0.0
    %v474 = vld [vmem:[#allocation2] sm:$0xff]
    %v475 = vpack.c.bf16 %v473, %v473
    %s476 = scalar_lea.vmem [#allocation6], 128
    %v477 = vld [vmem:[%s476] sm:$0xf]
    %v478 = vld [vmem:[%s476 + $0x4] sm:$0xf]
    %v479 = vld [vmem:[%s476 + $0x8] sm:$0xf]
    %v480 = vld [vmem:[%s476 + $0xc] sm:$0xf]
    %v481 = vld [vmem:[%s476 + $0x10] sm:$0xf]
    %v482 = vld [vmem:[%s476 + $0x14] sm:$0xf]
    %v483 = vld [vmem:[%s476 + $0x18] sm:$0xf]
    %v484 = vld [vmem:[%s476 + $0x1c] sm:$0xf]
    %v485 = vld [vmem:[%s476 + $0x20] sm:$0xf]
    %v486 = vld [vmem:[%s476 + $0x24] sm:$0xf]
    %v487 = vld [vmem:[%s476 + $0x28] sm:$0xf]
    %v488 = vld [vmem:[%s476 + $0x2c] sm:$0xf]
    %v489 = vld [vmem:[%s476 + $0x30] sm:$0xf]
    %v490 = vld [vmem:[%s476 + $0x34] sm:$0xf]
    %v491 = vld [vmem:[%s476 + $0x38] sm:$0xf]
    %v492 = vld [vmem:[%s476 + $0x3c] sm:$0xf]
    %v509 = vunpack.c.l.b16 %v477
    %v510 = vunpack.c.l.b16 %v478
    %v511 = vunpack.c.l.b16 %v479
    %v512 = vunpack.c.l.b16 %v480
    %v513 = vunpack.c.l.b16 %v481
    %v514 = vunpack.c.l.b16 %v482
    %v515 = vunpack.c.l.b16 %v483
    %v516 = vunpack.c.l.b16 %v484
    %v517 = vunpack.c.l.b16 %v485
    %v518 = vunpack.c.l.b16 %v486
    %v519 = vunpack.c.l.b16 %v487
    %v520 = vunpack.c.l.b16 %v488
    %v521 = vunpack.c.l.b16 %v489
    %v522 = vunpack.c.l.b16 %v490
    %v523 = vunpack.c.l.b16 %v491
    %v524 = vunpack.c.l.b16 %v492
    %v525 = vpack.c.b16 %v510, %v509
    %v526 = vpack.c.b16 %v512, %v511
    %v527 = vpack.c.b16 %v514, %v513
    %v528 = vpack.c.b16 %v516, %v515
    %v529 = vpack.c.b16 %v518, %v517
    %v530 = vpack.c.b16 %v520, %v519
    %v531 = vpack.c.b16 %v522, %v521
    %v532 = vpack.c.b16 %v524, %v523
    %541 = vmatprep.subr.bf16.mxu0 0
    %542 = vmatpush1.bf16.msra.mxu0 %v532
    %543 = vmatprep.subr.bf16.mxu0 0
    %544 = vmatpush1.bf16.msra.mxu0 %v531
    %545 = vmatprep.subr.bf16.mxu0 0
    %546 = vmatpush1.bf16.msra.mxu0 %v530
    %547 = vmatprep.subr.bf16.mxu0 0
    %548 = vmatpush1.bf16.msra.mxu0 %v529
    %549 = vmatprep.subr.bf16.mxu0 0
    %550 = vmatpush1.bf16.msra.mxu0 %v528
    %551 = vmatprep.subr.bf16.mxu0 0
    %552 = vmatpush1.bf16.msra.mxu0 %v527
    %553 = vmatprep.subr.bf16.mxu0 0
    %554 = vmatpush1.bf16.msra.mxu0 %v526
    %555 = vmatprep.subr.bf16.mxu0 0
    %556 = vmatpush1.bf16.msra.mxu0 %v525
    %557 = vmatprep.subr.bf16.mxu0 0
    %558 = vmatpush2.bf16.msra.mxu0 0
    %559 = vmatprep.subr.bf16.mxu0 0
    %560 = vmatpush2.bf16.msra.mxu0 0
    %561 = vmatprep.subr.bf16.mxu0 0
    %562 = vmatpush2.bf16.msra.mxu0 0
    %563 = vmatprep.subr.bf16.mxu0 0
    %564 = vmatpush2.bf16.msra.mxu0 0
    %565 = vmatprep.subr.bf16.mxu0 0
    %566 = vmatpush2.bf16.msra.mxu0 0
    %567 = vmatprep.subr.bf16.mxu0 0
    %568 = vmatpush2.bf16.msra.mxu0 0
    %569 = vmatprep.subr.bf16.mxu0 0
    %570 = vmatpush2.bf16.msra.mxu0 0
    %571 = vmatprep.subr.bf16.mxu0 0
    %572 = vmatpush2.bf16.msra.mxu0 0
    %573 = vmatprep.mubr.bf16.mxu0 0
    %574 = vmatmul.mubr.bf16.gmra.mxu0 %v475
    %v575 = vpop.f32.mrf.mxu0
    %v576 = vadd.f32 0.0, %v575
    %v577 = vpop.f32.mrf.mxu0
    %v578 = vpop.f32.mrf.mxu0
    %v579 = vpop.f32.mrf.mxu0
    %580 = vdwg.mxu0
    %v581 = vadd.f32 %v474, %v576
    %582 = vst [vmem:[#allocation2] sm:$0xff] %v581
    %s583 = scalar_lea.vmem %s1, 12
    %v584 = vld [vmem:[%s583] sm:$0xf]
    %v585 = vld [vmem:[%s583 + $0x10] sm:$0xf]
    %v586 = vld [vmem:[%s583 + $0x20] sm:$0xf]
    %v587 = vld [vmem:[%s583 + $0x30] sm:$0xf]
    %s588 = scalar_lea.vmem %s2, 3
    %v589 = vld [vmem:[%s588] sm:$0x1]
    %v591 = vlaneseq
    %v592 = vshrl.u32 %v591, 7
    %v593 = vsub.s32 0, %v592
    %v594 = vrot.slane %v589, %v593
    %v600 = vunpack.c.l.b16 %v584
    %v601 = vunpack.c.l.b16 %v585
    %v602 = vunpack.c.l.b16 %v586
    %v603 = vunpack.c.l.b16 %v587
    %v604 = vpack.c.b16 %v601, %v600
    %v605 = vpack.c.b16 %v603, %v602
    %608 = vmatprep.subr.bf16.mxu0 0
    %609 = vmatpush1.bf16.msra.mxu0 0
    %610 = vmatprep.subr.bf16.mxu0 0
    %611 = vmatpush1.bf16.msra.mxu0 0
    %612 = vmatprep.subr.bf16.mxu0 0
    %613 = vmatpush1.bf16.msra.mxu0 0
    %614 = vmatprep.subr.bf16.mxu0 0
    %615 = vmatpush1.bf16.msra.mxu0 0
    %616 = vmatprep.subr.bf16.mxu0 0
    %617 = vmatpush1.bf16.msra.mxu0 0
    %618 = vmatprep.subr.bf16.mxu0 0
    %619 = vmatpush1.bf16.msra.mxu0 0
    %620 = vmatprep.subr.bf16.mxu0 0
    %621 = vmatpush1.bf16.msra.mxu0 %v605
    %622 = vmatprep.subr.bf16.mxu0 0
    %623 = vmatpush1.bf16.msra.mxu0 %v604
    %624 = vmatprep.subr.bf16.mxu0 0
    %625 = vmatpush2.bf16.msra.mxu0 0
    %626 = vmatprep.subr.bf16.mxu0 0
    %627 = vmatpush2.bf16.msra.mxu0 0
    %628 = vmatprep.subr.bf16.mxu0 0
    %629 = vmatpush2.bf16.msra.mxu0 0
    %630 = vmatprep.subr.bf16.mxu0 0
    %631 = vmatpush2.bf16.msra.mxu0 0
    %632 = vmatprep.subr.bf16.mxu0 0
    %633 = vmatpush2.bf16.msra.mxu0 0
    %634 = vmatprep.subr.bf16.mxu0 0
    %635 = vmatpush2.bf16.msra.mxu0 0
    %636 = vmatprep.subr.bf16.mxu0 0
    %637 = vmatpush2.bf16.msra.mxu0 0
    %638 = vmatprep.subr.bf16.mxu0 0
    %639 = vmatpush2.bf16.msra.mxu0 0
    %640 = vmatprep.mubr.bf16.mxu0 0
    %641 = vmatmul.mubr.bf16.gmra.mxu0 %v82
    %v642 = vpop.f32.mrf.mxu0
    %v643 = vadd.f32 %v594, %v642
    %v644 = vpop.f32.mrf.mxu0
    %v645 = vpop.f32.mrf.mxu0
    %v646 = vpop.f32.mrf.mxu0
    %647 = vdwg.mxu0
    %v648 = vmax.f32 %v643, 0.0
    %v649 = vld [vmem:[#allocation2] sm:$0xff]
    %v650 = vpack.c.bf16 %v648, %v648
    %s651 = scalar_lea.vmem [#allocation6], 192
    %v652 = vld [vmem:[%s651] sm:$0xf]
    %v653 = vld [vmem:[%s651 + $0x4] sm:$0xf]
    %v654 = vld [vmem:[%s651 + $0x8] sm:$0xf]
    %v655 = vld [vmem:[%s651 + $0xc] sm:$0xf]
    %v656 = vld [vmem:[%s651 + $0x10] sm:$0xf]
    %v657 = vld [vmem:[%s651 + $0x14] sm:$0xf]
    %v658 = vld [vmem:[%s651 + $0x18] sm:$0xf]
    %v659 = vld [vmem:[%s651 + $0x1c] sm:$0xf]
    %v660 = vld [vmem:[%s651 + $0x20] sm:$0xf]
    %v661 = vld [vmem:[%s651 + $0x24] sm:$0xf]
    %v662 = vld [vmem:[%s651 + $0x28] sm:$0xf]
    %v663 = vld [vmem:[%s651 + $0x2c] sm:$0xf]
    %v664 = vld [vmem:[%s651 + $0x30] sm:$0xf]
    %v665 = vld [vmem:[%s651 + $0x34] sm:$0xf]
    %v666 = vld [vmem:[%s651 + $0x38] sm:$0xf]
    %v667 = vld [vmem:[%s651 + $0x3c] sm:$0xf]
    %v684 = vunpack.c.l.b16 %v652
    %v685 = vunpack.c.l.b16 %v653
    %v686 = vunpack.c.l.b16 %v654
    %v687 = vunpack.c.l.b16 %v655
    %v688 = vunpack.c.l.b16 %v656
    %v689 = vunpack.c.l.b16 %v657
    %v690 = vunpack.c.l.b16 %v658
    %v691 = vunpack.c.l.b16 %v659
    %v692 = vunpack.c.l.b16 %v660
    %v693 = vunpack.c.l.b16 %v661
    %v694 = vunpack.c.l.b16 %v662
    %v695 = vunpack.c.l.b16 %v663
    %v696 = vunpack.c.l.b16 %v664
    %v697 = vunpack.c.l.b16 %v665
    %v698 = vunpack.c.l.b16 %v666
    %v699 = vunpack.c.l.b16 %v667
    %v700 = vpack.c.b16 %v685, %v684
    %v701 = vpack.c.b16 %v687, %v686
    %v702 = vpack.c.b16 %v689, %v688
    %v703 = vpack.c.b16 %v691, %v690
    %v704 = vpack.c.b16 %v693, %v692
    %v705 = vpack.c.b16 %v695, %v694
    %v706 = vpack.c.b16 %v697, %v696
    %v707 = vpack.c.b16 %v699, %v698
    %716 = vmatprep.subr.bf16.mxu0 0
    %717 = vmatpush1.bf16.msra.mxu0 %v707
    %718 = vmatprep.subr.bf16.mxu0 0
    %719 = vmatpush1.bf16.msra.mxu0 %v706
    %720 = vmatprep.subr.bf16.mxu0 0
    %721 = vmatpush1.bf16.msra.mxu0 %v705
    %722 = vmatprep.subr.bf16.mxu0 0
    %723 = vmatpush1.bf16.msra.mxu0 %v704
    %724 = vmatprep.subr.bf16.mxu0 0
    %725 = vmatpush1.bf16.msra.mxu0 %v703
    %726 = vmatprep.subr.bf16.mxu0 0
    %727 = vmatpush1.bf16.msra.mxu0 %v702
    %728 = vmatprep.subr.bf16.mxu0 0
    %729 = vmatpush1.bf16.msra.mxu0 %v701
    %730 = vmatprep.subr.bf16.mxu0 0
    %731 = vmatpush1.bf16.msra.mxu0 %v700
    %732 = vmatprep.subr.bf16.mxu0 0
    %733 = vmatpush2.bf16.msra.mxu0 0
    %734 = vmatprep.subr.bf16.mxu0 0
    %735 = vmatpush2.bf16.msra.mxu0 0
    %736 = vmatprep.subr.bf16.mxu0 0
    %737 = vmatpush2.bf16.msra.mxu0 0
    %738 = vmatprep.subr.bf16.mxu0 0
    %739 = vmatpush2.bf16.msra.mxu0 0
    %740 = vmatprep.subr.bf16.mxu0 0
    %741 = vmatpush2.bf16.msra.mxu0 0
    %742 = vmatprep.subr.bf16.mxu0 0
    %743 = vmatpush2.bf16.msra.mxu0 0
    %744 = vmatprep.subr.bf16.mxu0 0
    %745 = vmatpush2.bf16.msra.mxu0 0
    %746 = vmatprep.subr.bf16.mxu0 0
    %747 = vmatpush2.bf16.msra.mxu0 0
    %748 = vmatprep.mubr.bf16.mxu0 0
    %749 = vmatmul.mubr.bf16.gmra.mxu0 %v650
    %v750 = vpop.f32.mrf.mxu0
    %v751 = vadd.f32 0.0, %v750
    %v752 = vpop.f32.mrf.mxu0
    %v753 = vpop.f32.mrf.mxu0
    %v754 = vpop.f32.mrf.mxu0
    %755 = vdwg.mxu0
    %v756 = vadd.f32 %v649, %v751
    %757 = vst [vmem:[#allocation2] sm:$0xff] %v756
    %v758 = vld [vmem:[#allocation2] sm:$0xff]
    %v759 = vld [vmem:[%s4] sm:$0x1]
    %v761 = vlaneseq
    %v762 = vshrl.u32 %v761, 7
    %v763 = vsub.s32 0, %v762
    %v764 = vrot.slane %v759, %v763
    %v766 = vadd.f32 %v758, %v764
    %v767 = vmax.f32 %v766, 0.0
    %v768 = vpack.c.bf16 %v767, %v767
    %v769 = vld [vmem:[%s5] sm:$0xf]
    %v770 = vld [vmem:[%s5 + $0x4] sm:$0xf]
    %v771 = vld [vmem:[%s5 + $0x8] sm:$0xf]
    %v772 = vld [vmem:[%s5 + $0xc] sm:$0xf]
    %v773 = vld [vmem:[%s5 + $0x10] sm:$0xf]
    %v774 = vld [vmem:[%s5 + $0x14] sm:$0xf]
    %v775 = vld [vmem:[%s5 + $0x18] sm:$0xf]
    %v776 = vld [vmem:[%s5 + $0x1c] sm:$0xf]
    %v777 = vld [vmem:[%s5 + $0x20] sm:$0xf]
    %v778 = vld [vmem:[%s5 + $0x24] sm:$0xf]
    %v779 = vld [vmem:[%s5 + $0x28] sm:$0xf]
    %v780 = vld [vmem:[%s5 + $0x2c] sm:$0xf]
    %v781 = vld [vmem:[%s5 + $0x30] sm:$0xf]
    %v782 = vld [vmem:[%s5 + $0x34] sm:$0xf]
    %v783 = vld [vmem:[%s5 + $0x38] sm:$0xf]
    %v784 = vld [vmem:[%s5 + $0x3c] sm:$0xf]
    %v785 = vld [vmem:[%s6] sm:$0x1]
    %v787 = vlaneseq
    %v788 = vshrl.u32 %v787, 7
    %v789 = vsub.s32 0, %v788
    %v790 = vrot.slane %v785, %v789
    %v808 = vunpack.c.l.b16 %v769
    %v809 = vunpack.c.l.b16 %v770
    %v810 = vunpack.c.l.b16 %v771
    %v811 = vunpack.c.l.b16 %v772
    %v812 = vunpack.c.l.b16 %v773
    %v813 = vunpack.c.l.b16 %v774
    %v814 = vunpack.c.l.b16 %v775
    %v815 = vunpack.c.l.b16 %v776
    %v816 = vunpack.c.l.b16 %v777
    %v817 = vunpack.c.l.b16 %v778
    %v818 = vunpack.c.l.b16 %v779
    %v819 = vunpack.c.l.b16 %v780
    %v820 = vunpack.c.l.b16 %v781
    %v821 = vunpack.c.l.b16 %v782
    %v822 = vunpack.c.l.b16 %v783
    %v823 = vunpack.c.l.b16 %v784
    %v824 = vpack.c.b16 %v809, %v808
    %v825 = vpack.c.b16 %v811, %v810
    %v826 = vpack.c.b16 %v813, %v812
    %v827 = vpack.c.b16 %v815, %v814
    %v828 = vpack.c.b16 %v817, %v816
    %v829 = vpack.c.b16 %v819, %v818
    %v830 = vpack.c.b16 %v821, %v820
    %v831 = vpack.c.b16 %v823, %v822
    %840 = vmatprep.subr.bf16.mxu0 0
    %841 = vmatpush1.bf16.msra.mxu0 %v831
    %842 = vmatprep.subr.bf16.mxu0 0
    %843 = vmatpush1.bf16.msra.mxu0 %v830
    %844 = vmatprep.subr.bf16.mxu0 0
    %845 = vmatpush1.bf16.msra.mxu0 %v829
    %846 = vmatprep.subr.bf16.mxu0 0
    %847 = vmatpush1.bf16.msra.mxu0 %v828
    %848 = vmatprep.subr.bf16.mxu0 0
    %849 = vmatpush1.bf16.msra.mxu0 %v827
    %850 = vmatprep.subr.bf16.mxu0 0
    %851 = vmatpush1.bf16.msra.mxu0 %v826
    %852 = vmatprep.subr.bf16.mxu0 0
    %853 = vmatpush1.bf16.msra.mxu0 %v825
    %854 = vmatprep.subr.bf16.mxu0 0
    %855 = vmatpush1.bf16.msra.mxu0 %v824
    %856 = vmatprep.subr.bf16.mxu0 0
    %857 = vmatpush2.bf16.msra.mxu0 0
    %858 = vmatprep.subr.bf16.mxu0 0
    %859 = vmatpush2.bf16.msra.mxu0 0
    %860 = vmatprep.subr.bf16.mxu0 0
    %861 = vmatpush2.bf16.msra.mxu0 0
    %862 = vmatprep.subr.bf16.mxu0 0
    %863 = vmatpush2.bf16.msra.mxu0 0
    %864 = vmatprep.subr.bf16.mxu0 0
    %865 = vmatpush2.bf16.msra.mxu0 0
    %866 = vmatprep.subr.bf16.mxu0 0
    %867 = vmatpush2.bf16.msra.mxu0 0
    %868 = vmatprep.subr.bf16.mxu0 0
    %869 = vmatpush2.bf16.msra.mxu0 0
    %870 = vmatprep.subr.bf16.mxu0 0
    %871 = vmatpush2.bf16.msra.mxu0 0
    %872 = vmatprep.mubr.bf16.mxu0 0
    %873 = vmatmul.mubr.bf16.gmra.mxu0 %v768
    %v874 = vpop.f32.mrf.mxu0
    %v875 = vadd.f32 %v790, %v874
    %v876 = vpop.f32.mrf.mxu0
    %v877 = vpop.f32.mrf.mxu0
    %v878 = vpop.f32.mrf.mxu0
    %879 = vdwg.mxu0
    %v880 = vtanh.pop %v875
    %vm881 = vcmask 64512
    %882 = vst.msk [vmem:[#allocation8] sm:$0xff] %vm881, %v880
    // Predicated region
    $region38: #{tpu_custom_call.1} parent=1 // pred_check
      _
    $region39: #{tpu_custom_call.1} parent=1 // pred_check_branch
      %884 = sbr.rel (0) target = $region41
    $region40: #{tpu_custom_call.1} parent=1 // pred_region
      %s886 = ssub.s32 128, 128
      %887 = vsyncadd [#allocation5], %s886
      %s889 = sshll.u32 [#allocation8], 4
      %s890 = int_to_ptr.vmem [resolvable:$true] %s889
      %892 = dma.vmem_to_hbm [thread:$0]  %s890, 128, %s7, [#allocation5]
    $region41: #{tpu_custom_call.1} parent=1 // pred_fallthru
      _
    // Predicated region
    $region42: #{tpu_custom_call.1} parent=1 // pred_check
      _
    $region43: #{tpu_custom_call.1} parent=1 // pred_check_branch
      %894 = sbr.rel (0) target = $region45
    $region44: #{tpu_custom_call.1} parent=1 // pred_region
      %895 = dma.done [#allocation5], 128
    $region45: #{tpu_custom_call.1} parent=1 // pred_fallthru
      _
    %896 = vsyncpa [#allocation4], 1
    %897 = vsyncpa [#allocation7], 1
    %898 = vsyncpa [#allocation5], 1

</llo_original>
